<compile_context>
chip_gen: v7x
topology: tpu7x:2x2x1
jax: 0.10.0
libtpu: 0.0.40
codegen_flags: <defaults>
</compile_context>

<pallas_src>
import jax
import jax.numpy as jnp
from jax.experimental import pallas as pl
from jax.experimental.pallas import tpu as pltpu


_LANE = 128
_MAX_LANES = 4096                 # cap on the lane width of the flattened view
_TARGET_TILE_BYTES = 2 << 20      # ~2 MiB tiles: saturate HBM BW, tiny VMEM footprint
_MIN_GRID_BLOCKS = 8              # keep >=8 row blocks when possible (v7x 2-TC sharding)
_MAX_LIVE_VMEM_BYTES = 40 * 1024 * 1024  # 4 live tiles must stay well under 64 MiB (v7x)


def _identity_cast_kernel(x_ref, o_ref):
    # Straight VMEM tile copy; the (optional) int->float cast rides the VPU for
    # free on a DMA-bound copy.
    o_ref[...] = x_ref[...].astype(o_ref.dtype)


def _sublane_granularity(*dtypes):
    """Dtype-aware sublane rounding: 8 for 4-byte, 16 for bf16, 32 for 1-byte."""
    g = 8
    for dt in dtypes:
        g = max(g, 32 // max(1, jnp.dtype(dt).itemsize))
    return g


def _lane_dense_cols(total):
    """Largest multiple of 128 (<= _MAX_LANES) dividing `total`, or None."""
    if total % _LANE != 0:
        return None
    c = (min(_MAX_LANES, total) // _LANE) * _LANE
    while c >= _LANE:
        if total % c == 0:
            return c
        c -= _LANE
    return None


def _row_tile(n_rows, row_bytes, gran):
    """Row-tile size: full extent for tiny inputs, else a multiple of `gran`
    targeting ~2 MiB tiles while keeping >= _MIN_GRID_BLOCKS grid steps."""
    if n_rows <= gran:
        return n_rows  # full extent; bypasses the 8-sublane divisibility rule
    tm = max(gran, (_TARGET_TILE_BYTES // max(1, row_bytes)) // gran * gran)
    cap = max(gran, (pl.cdiv(n_rows, _MIN_GRID_BLOCKS) // gran) * gran)
    return min(tm, cap)


def summary_statistics_embedding(x, use_kernel=None):
    """Pallas equivalent of SummaryStatisticsEmbedding().forward(x).

    Returns x reshaped to (x.shape[0], -1); non-float inputs are cast to
    float32 (mirroring torch.from_numpy(x).float()).

    By default this is a metadata-only reshape (an identity embedding can
    never beat that); pass use_kernel=True to route through the Pallas copy
    kernel (used for testing / when a materialized copy is explicitly wanted).
    """
    x = jnp.asarray(x)
    out_dtype = x.dtype if jnp.issubdtype(x.dtype, jnp.floating) else jnp.float32

    rows = x.shape[0]
    feat = 1
    for d in x.shape[1:]:
        feat *= d
    x2d = x.reshape(rows, feat)  # row-major reshape: metadata only, 0 HBM traffic
    total = rows * feat

    if use_kernel is None:
        use_kernel = False  # metadata reshape is strictly faster for an identity
    if not use_kernel or total == 0:
        return x2d.astype(out_dtype)

    in_item = jnp.dtype(x.dtype).itemsize
    out_item = jnp.dtype(out_dtype).itemsize
    gran = _sublane_granularity(x.dtype, out_dtype)

    # Prefer a lane-dense flattened view: 128-lane unmasked stores and >= full
    # sublanes even for skinny logical shapes; no padding ever.
    cols = _lane_dense_cols(total)
    if cols is not None:
        view = x2d.reshape(total // cols, cols)  # metadata only
    else:
        # Awkward total: tile rows, keep the full feature extent on the lane
        # axis (a block dim equal to the full array dim bypasses the (8,128)
        # rule); a partial tail row-block is boundary-masked by Pallas.
        view = x2d
        cols = feat

    n_rows = view.shape[0]
    row_bytes = cols * max(in_item, out_item)
    tm = _row_tile(n_rows, row_bytes, gran)

    # in + out tiles, each double-buffered.
    live_bytes = 2 * tm * cols * (in_item + out_item)
    if live_bytes > _MAX_LIVE_VMEM_BYTES:
        # TODO(synk): un-tileable wide row (feat not a multiple of 128 and too
        # large for VMEM) -- fall back to the metadata-only reshape.
        return x2d.astype(out_dtype)

    grid = (pl.cdiv(n_rows, tm),)
    vmem_limit = int(min(48 * 1024 * 1024,
                         max(16 * 1024 * 1024, live_bytes + (2 << 20))))

    out = pl.pallas_call(
        _identity_cast_kernel,
        out_shape=jax.ShapeDtypeStruct(view.shape, out_dtype),
        grid_spec=pltpu.PrefetchScalarGridSpec(
            num_scalar_prefetch=0,
            grid=grid,
            in_specs=[pl.BlockSpec((tm, cols), lambda i: (i, 0))],
            out_specs=pl.BlockSpec((tm, cols), lambda i: (i, 0)),
        ),
        compiler_params=pltpu.CompilerParams(
            dimension_semantics=("parallel",),
            vmem_limit_bytes=vmem_limit,
        ),
        cost_estimate=pl.CostEstimate(
            flops=0,
            transcendentals=0,
            bytes_accessed=int(total * (in_item + out_item)),
        ),
    )(view)

    return out.reshape(rows, feat)  # metadata only


if __name__ == "__main__":
    key = jax.random.PRNGKey(0)
    k0, k1, k2, k3 = jax.random.split(key, 4)
    ok = True

    # 1. Batched joint-SFS-like input, lane-dense flattened kernel path (forced).
    x = jax.random.normal(k0, (2, 4, 16, 16), dtype=jnp.float32)
    ref = x.reshape(x.shape[0], -1)
    out = jax.block_until_ready(summary_statistics_embedding(x, use_kernel=True))
    ok &= (out.shape == ref.shape) and bool(jnp.array_equal(out, ref))

    # 2. Multi-block lane-dense path (several row tiles on the parallel grid).
    xb = jax.random.normal(k1, (8, 64, 128), dtype=jnp.float32)
    outb = jax.block_until_ready(summary_statistics_embedding(xb, use_kernel=True))
    ok &= bool(jnp.array_equal(outb, xb.reshape(8, -1)))

    # 3. Non-aligned joint SFS: full-extent fallback blocks, no padding.
    x2 = jax.random.normal(k2, (3, 17, 33), dtype=jnp.float32)
    out2 = jax.block_until_ready(summary_statistics_embedding(x2, use_kernel=True))
    ok &= bool(jnp.array_equal(out2, x2.reshape(3, -1)))

    # 4. Single-population SFS vector: (num_samples + 1,) -> (num_samples + 1, 1).
    x3 = jax.random.normal(k3, (16,), dtype=jnp.float32)
    out3 = jax.block_until_ready(summary_statistics_embedding(x3, use_kernel=True))
    ok &= (out3.shape == (16, 1)) and bool(jnp.array_equal(out3, x3.reshape(16, -1)))

    # 5. Integer input: float32 cast fused inside the kernel.
    xi = jnp.arange(2 * 5 * 7, dtype=jnp.int32).reshape(2, 5, 7)
    outi = jax.block_until_ready(summary_statistics_embedding(xi, use_kernel=True))
    ok &= (outi.dtype == jnp.float32) and bool(
        jnp.array_equal(outi, xi.reshape(2, -1).astype(jnp.float32)))

    # 6. Default (auto) path: metadata-only reshape short-circuit.
    outd = jax.block_until_ready(summary_statistics_embedding(x))
    ok &= (outd.shape == ref.shape) and bool(jnp.array_equal(outd, ref))

    if ok:
        print("KERNEL_OK")
</pallas_src>

<mosaic_0001>
module attributes {stable_mosaic.version = 11 : i64} {
  func.func @_identity_cast_kernel(%arg0: i32, %arg1: memref<1x2048xf32, #tpu.memory_space<vmem>>, %arg2: memref<1x2048xf32, #tpu.memory_space<vmem>>) attributes {dimension_semantics = [#tpu.dimension_semantics<parallel>], iteration_bounds = array<i64: 1>, scalar_prefetch = 0 : i64, scratch_operands = 0 : i64, tpu.core_type = #tpu.core_type<tc>, window_params = [{transform_indices = @transform_0, window_bounds = array<i64: 1, 2048>}, {transform_indices = @transform_1, window_bounds = array<i64: 1, 2048>}]} {
    %c0 = arith.constant 0 : index
    %c0_0 = arith.constant 0 : index
    %0 = vector.load %arg1[%c0, %c0_0] : memref<1x2048xf32, #tpu.memory_space<vmem>>, vector<1x2048xf32>
    %c0_1 = arith.constant 0 : index
    %c0_2 = arith.constant 0 : index
    %1 = vector.load %arg2[%c0_1, %c0_2] : memref<1x2048xf32, #tpu.memory_space<vmem>>, vector<1x2048xf32>
    tpu.vector_store %arg2[%c0_1, %c0_2], %0 {strides = array<i32>} : memref<1x2048xf32, #tpu.memory_space<vmem>>, vector<1x2048xf32>,
    return
  }
  func.func @transform_0(%arg0: i32) -> (i32, i32) {
    %c0_i32 = arith.constant 0 : i32
    %c0_i32_0 = arith.constant 0 : i32
    return %arg0, %c0_i32 : i32, i32
  }
  func.func @transform_1(%arg0: i32) -> (i32, i32) {
    %c0_i32 = arith.constant 0 : i32
    %c0_i32_0 = arith.constant 0 : i32
    return %arg0, %c0_i32 : i32, i32
  }
}

</mosaic_0001>

<llo_original>
// kernel: tpu_custom_call.1
$region0: #{tpu_custom_call.1}
  #allocation0 [shape = 'u32[]', space=smem, size = 0x4, offset = 0x4, fixed_abs, tag = 'smem constant byte address 0x4 - core index']
  #allocation1 [shape = 'u32[144,128]{1,0:T(1,128)}', space=vmem, size = 0x12000, scoped, tag = 'internal scratch']
  %s0 = inlined_call_operand.hbm [shape: f32[1,2048], index: 0, kind: input, shape index: {}]
  %s1 = inlined_call_operand.hbm [shape: f32[1,2048], index: 1, kind: output, shape index: {}]
  %s2 = sld [smem:[#allocation0]]
  $region18: #{tpu_custom_call.1} parent=0
    _
  %s4 = ssub.s32 1, %s2
  %s5 = scalar_select 0, %s4, %s2
  $region1: #{tpu_custom_call.1} parent=0
    #allocation2 [shape = 'u8[8192]{0}', space=vmem, size = 0x2000, scoped, tag = 'input window, operand 0, single buffered']
    #allocation3 [shape = 's32[1]{0}', space=sflag, size = 0x4, scoped, tag = 'scoped memory for tpu_custom_call.1']
    #allocation4 [shape = 's32[1]{0}', space=sflag, size = 0x4, scoped, tag = 'scoped memory for tpu_custom_call.1']
    #allocation5 [shape = 'u8[8192]{0}', space=vmem, size = 0x2000, scoped, tag = 'output window, operand 0, single buffered']
    %6 = vsyncpa [#allocation3], 0
    %7 = vsyncpa [#allocation4], 0
    // Predicated region
    $region2: #{tpu_custom_call.1} parent=1 // pred_check
      _
    $region3: #{tpu_custom_call.1} parent=1 // pred_check_branch
      %9 = sbr.rel (0) target = $region5
    $region4: #{tpu_custom_call.1} parent=1 // pred_region
      %s11 = ssub.s32 256, 256
      %12 = vsyncadd [#allocation3], %s11
      %s14 = sshll.u32 [#allocation2], 4
      %s15 = int_to_ptr.vmem [resolvable:$true] %s14
      %17 = dma.hbm_to_vmem [thread:$0]  %s0, 256, %s15, [#allocation3]
    $region5: #{tpu_custom_call.1} parent=1 // pred_fallthru
      _
    // Predicated region
    $region6: #{tpu_custom_call.1} parent=1 // pred_check
      _
    $region7: #{tpu_custom_call.1} parent=1 // pred_check_branch
      %19 = sbr.rel (0) target = $region9
    $region8: #{tpu_custom_call.1} parent=1 // pred_region
      %20 = dma.done [#allocation3], 256
    $region9: #{tpu_custom_call.1} parent=1 // pred_fallthru
      _
    %v21 = vld [vmem:[#allocation2] sm:$0xff]
    %v22 = vld [vmem:[#allocation2 + $0x8] sm:$0xff]
    %23 = vst [vmem:[#allocation5] sm:$0xff] %v21
    %24 = vst [vmem:[#allocation5 + $0x8] sm:$0xff] %v22
    // Predicated region
    $region10: #{tpu_custom_call.1} parent=1 // pred_check
      _
    $region11: #{tpu_custom_call.1} parent=1 // pred_check_branch
      %26 = sbr.rel (0) target = $region13
    $region12: #{tpu_custom_call.1} parent=1 // pred_region
      %s28 = ssub.s32 256, 256
      %29 = vsyncadd [#allocation4], %s28
      %s31 = sshll.u32 [#allocation5], 4
      %s32 = int_to_ptr.vmem [resolvable:$true] %s31
      %34 = dma.vmem_to_hbm [thread:$0]  %s32, 256, %s1, [#allocation4]
    $region13: #{tpu_custom_call.1} parent=1 // pred_fallthru
      _
    // Predicated region
    $region14: #{tpu_custom_call.1} parent=1 // pred_check
      _
    $region15: #{tpu_custom_call.1} parent=1 // pred_check_branch
      %36 = sbr.rel (0) target = $region17
    $region16: #{tpu_custom_call.1} parent=1 // pred_region
      %37 = dma.done [#allocation4], 256
    $region17: #{tpu_custom_call.1} parent=1 // pred_fallthru
      _
    %38 = vsyncpa [#allocation3], 1
    %39 = vsyncpa [#allocation4], 1

</llo_original>
